<compile_context>
chip_gen: v5e
topology: v5e:2x2
jax: 0.10.0
libtpu: 0.0.40
codegen_flags: <defaults>
</compile_context>

<pallas_src>
import functools

import numpy as np

import jax
import jax.numpy as jnp
from jax import lax
from jax.experimental import pallas as pl
from jax.experimental.pallas import tpu as pltpu

LANE = 128           # TPU lane width
SUB = 8              # f32 sublane tile
DILS = (1, 2, 4, 8)  # dilations of the d1/d2/d4/d8 branches
TARGET_LANES = 512   # aim for about this many packed lanes per grid step


def _round_up(v, m):
    return -(-v // m) * m


def _dilated_kernel(alpha_ref, pos_ref, x_ref, c1w_ref, c1b_ref, wall_ref,
                    s2_ref, b2_ref, out_ref, *, T, offs, pwidths, nOut_p, add):
    Lt = x_ref.shape[-1]                      # packed, lane-padded block length
    a1 = alpha_ref[0]                         # PReLU slopes from SMEM
    a2 = alpha_ref[1]
    pos = pos_ref[...]                        # (1, Lt) int32: position within batch segment

    x = x_ref[...]                            # (Cx, Lt)

    # --- c1 (1x1 conv, BN1 folded into weights/bias) + PReLU -----------------
    h = jnp.dot(c1w_ref[...], x, preferred_element_type=jnp.float32) + c1b_ref[...]
    h = jnp.where(h >= 0, h, a1 * h)          # (n_p, Lt)

    # --- all 12 dilated-conv taps in ONE fused matmul -------------------------
    # rows of m: [left taps (k=0); center taps (k=1); right taps (k=2)],
    # each block of nOut_p rows laid out in padded (8-aligned) channel groups.
    m = jnp.dot(wall_ref[...], h, preferred_element_type=jnp.float32)   # (3*nOut_p, Lt)
    m_l = m[0:nOut_p]
    m_c = m[nOut_p:2 * nOut_p]
    m_r = m[2 * nOut_p:3 * nOut_p]

    vals = []
    acc = None
    for gi, (off, w, d) in enumerate(zip(offs, pwidths, DILS)):
        gl = m_l[off:off + w]                 # 8-aligned sublane slices
        gc = m_c[off:off + w]
        gr = m_r[off:off + w]
        # left tap (k=0): out[t] += Wl @ h[t-d]  -> roll right by d; zero where
        # t < d (conv zero padding and batch-segment boundary in packed lanes).
        lmask = (pos >= d).astype(jnp.float32)
        left = pltpu.roll(gl, d, axis=1) * lmask
        # right tap (k=2): out[t] += Wr @ h[t+d] -> roll left by d; zero where t >= T-d.
        rmask = (pos < T - d).astype(jnp.float32)
        right = pltpu.roll(gr, Lt - d, axis=1) * rmask
        branch = left + gc + right            # full 3-tap dilated conv for this group
        if gi == 0:
            vals.append(branch)               # d1
        else:
            acc = branch if acc is None else acc + branch
            vals.append(acc)                  # add1 = d2, add2 = add1+d4, add3 = add2+d8
    c = jnp.concatenate(vals, axis=0)         # (nOut_p, Lt), concat of aligned tiles

    if add:
        c = c + x                             # residual; x already in padded group layout
    c = c * s2_ref[...] + b2_ref[...]         # folded BatchNorm1d #2
    out_ref[...] = jnp.where(c >= 0, c, a2 * c).astype(out_ref.dtype)   # PReLU, single store


def dilated_convnet_t(x, kparams):
    """x: (B, nIn, T) float32.  kparams: output of _fold_for_kernel."""
    B, nIn, T = x.shape
    assert nIn == kparams["nIn"]
    add = kparams["add"]
    Cx = kparams["Cx"]
    nOut_p = kparams["nOut_p"]
    row_idx = kparams["row_idx"]

    # Batches packed per grid step: fill >=128 lanes, cap ~TARGET_LANES, whole
    # batch elements per block so the segment masks stay block-local.  With
    # B > Bt this yields >= 2 parallel grid steps (both v7x TensorCores busy).
    Bt = max(1, min(B, TARGET_LANES // max(T, 1)))
    nblk = -(-B // Bt)
    Bp = nblk * Bt
    Ltile = _round_up(Bt * T, LANE)

    # Channel layout: padded group layout when the residual add is taken
    # (so the in-kernel residual slice is sublane-aligned), else zero-pad.
    if add:
        xc = jnp.zeros((B, Cx, T), x.dtype).at[:, row_idx, :].set(x)
    else:
        xc = jnp.pad(x, ((0, 0), (0, Cx - nIn), (0, 0)))
    if Bp != B:
        xc = jnp.pad(xc, ((0, Bp - B), (0, 0), (0, 0)))
    xp = xc.reshape(nblk, Bt, Cx, T).transpose(0, 2, 1, 3).reshape(nblk, Cx, Bt * T)
    if Ltile != Bt * T:
        xp = jnp.pad(xp, ((0, 0), (0, 0), (0, Ltile - Bt * T)))

    # per-lane position inside its batch segment (precomputed: no iota/mod in-kernel)
    pos = jnp.asarray((np.arange(Ltile, dtype=np.int32) % T).reshape(1, Ltile))

    weights = (kparams["c1_w"], kparams["c1_b"], kparams["w_all"],
               kparams["scale2"], kparams["shift2"])

    def full_spec(a):
        nd = a.ndim
        return pl.BlockSpec(a.shape, lambda g, nd=nd: (0,) * nd)

    in_specs = [pl.BlockSpec(memory_space=pltpu.MemorySpace.SMEM),     # PReLU alphas
                full_spec(pos),                                        # lane positions
                pl.BlockSpec((None, Cx, Ltile), lambda g: (g, 0, 0))]  # one batch block / step
    in_specs += [full_spec(a) for a in weights]

    grid_spec = pltpu.PrefetchScalarGridSpec(
        num_scalar_prefetch=0,
        grid=(nblk,),
        in_specs=in_specs,
        out_specs=pl.BlockSpec((None, nOut_p, Ltile), lambda g: (g, 0, 0)),
    )

    out = pl.pallas_call(
        functools.partial(_dilated_kernel, T=T, offs=kparams["offs"],
                          pwidths=kparams["pwidths"], nOut_p=nOut_p, add=add),
        out_shape=jax.ShapeDtypeStruct((nblk, nOut_p, Ltile), x.dtype),
        grid_spec=grid_spec,
        compiler_params=pltpu.CompilerParams(
            dimension_semantics=("parallel",)),
    )(kparams["alphas"], pos, xp, *weights)

    # ---- unpack: lanes -> (batch, T), padded group rows -> dense channels -----
    out = out[:, :, :Bt * T].reshape(nblk, nOut_p, Bt, T)
    out = out.transpose(0, 2, 1, 3).reshape(Bp, nOut_p, T)[:B]
    return out[:, row_idx, :]


def _make_params(key, nIn, nOut):
    n = nOut // 4
    n1 = nOut - 3 * n
    ks = jax.random.split(key, 20)
    p = {
        "c1_w": jax.random.normal(ks[0], (n, nIn, 1), jnp.float32) * 0.3,
        "c1_b": jax.random.normal(ks[1], (n,), jnp.float32) * 0.1,
        "bn1_gamma": 1.0 + 0.1 * jax.random.normal(ks[2], (n,), jnp.float32),
        "bn1_beta": 0.1 * jax.random.normal(ks[3], (n,), jnp.float32),
        "bn1_mean": 0.1 * jax.random.normal(ks[4], (n,), jnp.float32),
        "bn1_var": 0.5 + 0.5 * jnp.abs(jax.random.normal(ks[5], (n,), jnp.float32)),
        "d1_w": jax.random.normal(ks[6], (n1, n, 3), jnp.float32) * 0.3,
        "d2_w": jax.random.normal(ks[7], (n, n, 3), jnp.float32) * 0.3,
        "d4_w": jax.random.normal(ks[8], (n, n, 3), jnp.float32) * 0.3,
        "d8_w": jax.random.normal(ks[9], (n, n, 3), jnp.float32) * 0.3,
        "bn2_gamma": 1.0 + 0.1 * jax.random.normal(ks[10], (nOut,), jnp.float32),
        "bn2_beta": 0.1 * jax.random.normal(ks[11], (nOut,), jnp.float32),
        "bn2_mean": 0.1 * jax.random.normal(ks[12], (nOut,), jnp.float32),
        "bn2_var": 0.5 + 0.5 * jnp.abs(jax.random.normal(ks[13], (nOut,), jnp.float32)),
        "a1": jnp.float32(0.25),   # PReLU default init
        "a2": jnp.float32(0.25),
    }
    return p, n, n1


def _fold_for_kernel(p, nIn, nOut, add=True, eps=1e-5):
    """Host-side folding: BN into conv/scale-shift, tap stacking, sublane padding."""
    n = nOut // 4
    n1 = nOut - 3 * n
    assert n >= 1 and n1 + 3 * n == nOut
    add = bool(add) and (nIn == nOut)

    widths = (n1, n, n, n)
    pwidths = tuple(_round_up(w, SUB) for w in widths)          # 8-aligned group widths
    offs = (0, pwidths[0], pwidths[0] + pwidths[1],
            pwidths[0] + pwidths[1] + pwidths[2])
    nOut_p = sum(pwidths)
    n_p = _round_up(n, SUB)

    # final-concat channel c lives at padded-group row row_idx[c]
    row_idx = np.concatenate(
        [offs[g] + np.arange(widths[g]) for g in range(4)]).astype(np.int32)

    scale1 = p["bn1_gamma"] / jnp.sqrt(p["bn1_var"] + eps)
    shift1 = p["bn1_beta"] - p["bn1_mean"] * scale1
    scale2 = p["bn2_gamma"] / jnp.sqrt(p["bn2_var"] + eps)
    shift2 = p["bn2_beta"] - p["bn2_mean"] * scale2

    # c1 (1x1 conv) with BN1 folded; columns permuted to match the kernel's x layout.
    c1w = np.asarray(p["c1_w"][:, :, 0] * scale1[:, None])       # (n, nIn)
    c1b = np.asarray(scale1 * p["c1_b"] + shift1)                # (n,)
    Cx = nOut_p if add else _round_up(nIn, SUB)
    c1w_p = np.zeros((n_p, Cx), np.float32)
    if add:
        c1w_p[:n, row_idx] = c1w                                 # x arrives in group layout
    else:
        c1w_p[:n, :nIn] = c1w
    c1b_p = np.zeros((n_p, 1), np.float32)
    c1b_p[:n, 0] = c1b

    # All dilated-conv taps stacked into one (3*nOut_p, n_p) matrix: [left; center; right].
    dws = (p["d1_w"], p["d2_w"], p["d4_w"], p["d8_w"])
    w_all = np.zeros((3, nOut_p, n_p), np.float32)
    for g in range(4):
        wg = np.asarray(dws[g])                                  # (widths[g], n, 3)
        for k in range(3):
            w_all[k, offs[g]:offs[g] + widths[g], :n] = wg[:, :, k]
    w_all = w_all.reshape(3 * nOut_p, n_p)

    # BN2 scale/shift in padded group layout (padding rows stay exactly zero).
    s2 = np.ones((nOut_p, 1), np.float32)
    b2 = np.zeros((nOut_p, 1), np.float32)
    s2[row_idx, 0] = np.asarray(scale2)
    b2[row_idx, 0] = np.asarray(shift2)

    return {
        "alphas": jnp.asarray(np.stack([np.float32(p["a1"]), np.float32(p["a2"])])),
        "c1_w": jnp.asarray(c1w_p), "c1_b": jnp.asarray(c1b_p),
        "w_all": jnp.asarray(w_all),
        "scale2": jnp.asarray(s2), "shift2": jnp.asarray(b2),
        "add": add, "nIn": nIn, "nOut": nOut, "nOut_p": nOut_p, "Cx": Cx,
        "offs": offs, "pwidths": pwidths, "row_idx": row_idx,
    }


def _reference_forward(x, p, eps=1e-5):
    """Pure-JAX reference matching the PyTorch eval-mode forward."""
    def bn(h, g, b, m, v):
        return (h - m[None, :, None]) / jnp.sqrt(v[None, :, None] + eps) \
            * g[None, :, None] + b[None, :, None]

    def prelu(h, a):
        return jnp.where(h >= 0, h, a * h)

    def conv1d(h, w, d=1, pad=0):
        dn = lax.conv_dimension_numbers(h.shape, w.shape, ("NCH", "OIH", "NCH"))
        return lax.conv_general_dilated(h, w, window_strides=(1,),
                                        padding=[(pad, pad)], rhs_dilation=(d,),
                                        dimension_numbers=dn)

    h = conv1d(x, p["c1_w"]) + p["c1_b"][None, :, None]
    h = prelu(bn(h, p["bn1_gamma"], p["bn1_beta"], p["bn1_mean"], p["bn1_var"]), p["a1"])
    d1 = conv1d(h, p["d1_w"], 1, 1)
    d2 = conv1d(h, p["d2_w"], 2, 2)
    d4 = conv1d(h, p["d4_w"], 4, 4)
    d8 = conv1d(h, p["d8_w"], 8, 8)
    add1 = d2
    add2 = add1 + d4
    add3 = add2 + d8
    c = jnp.concatenate([d1, add1, add2, add3], axis=1)
    c = x + c                                                  # add=True (nIn == nOut)
    c = bn(c, p["bn2_gamma"], p["bn2_beta"], p["bn2_mean"], p["bn2_var"])
    return prelu(c, p["a2"])


if __name__ == "__main__":
    B, nIn, nOut, T = 2, 16, 16, 16                            # nIn == nOut -> add=True

    key = jax.random.PRNGKey(0)
    kx, kp = jax.random.split(key)
    x = jax.random.normal(kx, (B, nIn, T), jnp.float32)

    params, _, _ = _make_params(kp, nIn, nOut)
    kparams = _fold_for_kernel(params, nIn, nOut, add=True)

    out = jax.block_until_ready(dilated_convnet_t(x, kparams))
    ref = jax.block_until_ready(_reference_forward(x, params))

    assert out.shape == (B, nOut, T)
    assert jnp.allclose(out, ref, rtol=1e-4, atol=1e-4), \
        f"max abs err {jnp.max(jnp.abs(out - ref))}"

    print("KERNEL_OK")
</pallas_src>

<mosaic_0001>
module attributes {stable_mosaic.version = 11 : i64} {
  func.func @_dilated_kernel(%arg0: i32, %arg1: memref<2xf32, #tpu.memory_space<smem>>, %arg2: memref<1x128xi32, #tpu.memory_space<vmem>>, %arg3: memref<1x32x128xf32, #tpu.memory_space<vmem>>, %arg4: memref<8x32xf32, #tpu.memory_space<vmem>>, %arg5: memref<8x1xf32, #tpu.memory_space<vmem>>, %arg6: memref<96x8xf32, #tpu.memory_space<vmem>>, %arg7: memref<32x1xf32, #tpu.memory_space<vmem>>, %arg8: memref<32x1xf32, #tpu.memory_space<vmem>>, %arg9: memref<1x32x128xf32, #tpu.memory_space<vmem>>) attributes {dimension_semantics = [#tpu.dimension_semantics<parallel>], iteration_bounds = array<i64: 1>, scalar_prefetch = 0 : i64, scratch_operands = 0 : i64, tpu.core_type = #tpu.core_type<tc>, window_params = [{transform_indices = @transform_0, window_bounds = array<i64: 2>}, {pipeline_mode = #tpu.pipeline_mode<synchronous>, transform_indices = @transform_1, window_bounds = array<i64: 1, 128>}, {transform_indices = @transform_2, window_bounds = array<i64: 1, 32, 128>}, {pipeline_mode = #tpu.pipeline_mode<synchronous>, transform_indices = @transform_3, window_bounds = array<i64: 8, 32>}, {pipeline_mode = #tpu.pipeline_mode<synchronous>, transform_indices = @transform_4, window_bounds = array<i64: 8, 1>}, {pipeline_mode = #tpu.pipeline_mode<synchronous>, transform_indices = @transform_5, window_bounds = array<i64: 96, 8>}, {pipeline_mode = #tpu.pipeline_mode<synchronous>, transform_indices = @transform_6, window_bounds = array<i64: 32, 1>}, {pipeline_mode = #tpu.pipeline_mode<synchronous>, transform_indices = @transform_7, window_bounds = array<i64: 32, 1>}, {transform_indices = @transform_8, window_bounds = array<i64: 1, 32, 128>}]} {
    %c0 = arith.constant 0 : index
    %0 = memref.load %arg1[%c0] : memref<2xf32, #tpu.memory_space<smem>>
    %c1 = arith.constant 1 : index
    %1 = memref.load %arg1[%c1] : memref<2xf32, #tpu.memory_space<smem>>
    %c0_0 = arith.constant 0 : index
    %c0_1 = arith.constant 0 : index
    %2 = vector.load %arg2[%c0_0, %c0_1] : memref<1x128xi32, #tpu.memory_space<vmem>>, vector<1x128xi32>
    %c0_2 = arith.constant 0 : index
    %c0_3 = arith.constant 0 : index
    %c0_4 = arith.constant 0 : index
    %3 = vector.load %arg3[%c0_2, %c0_3, %c0_4] : memref<1x32x128xf32, #tpu.memory_space<vmem>>, vector<1x32x128xf32>
    %4 = vector.shape_cast %3 : vector<1x32x128xf32> to vector<32x128xf32>
    %c0_5 = arith.constant 0 : index
    %c0_6 = arith.constant 0 : index
    %5 = vector.load %arg4[%c0_5, %c0_6] : memref<8x32xf32, #tpu.memory_space<vmem>>, vector<8x32xf32>
    %cst = arith.constant dense<0.000000e+00> : vector<8x128xf32>
    %6 = tpu.matmul %5, %4, %cst {dimension_numbers = #tpu.dot_dimension_numbers<[1], [0], [0], [1], [0, 0, 1, 1], [], []>} : vector<8x32xf32>, vector<32x128xf32>, vector<8x128xf32> -> vector<8x128xf32>
    %c0_7 = arith.constant 0 : index
    %c0_8 = arith.constant 0 : index
    %7 = vector.load %arg5[%c0_7, %c0_8] : memref<8x1xf32, #tpu.memory_space<vmem>>, vector<8x1xf32>
    %8 = vector.broadcast %7 : vector<8x1xf32> to vector<8x128xf32>
    %9 = arith.addf %6, %8 : vector<8x128xf32>
    %cst_9 = arith.constant 0.000000e+00 : f32
    %10 = vector.broadcast %cst_9 : f32 to vector<8x128xf32>
    %11 = arith.cmpf oge, %9, %10 : vector<8x128xf32>
    %12 = vector.broadcast %0 : f32 to vector<8x128xf32>
    %13 = arith.mulf %12, %9 : vector<8x128xf32>
    %14 = arith.select %11, %9, %13 : vector<8x128xi1>, vector<8x128xf32>
    %c0_10 = arith.constant 0 : index
    %c0_11 = arith.constant 0 : index
    %15 = vector.load %arg6[%c0_10, %c0_11] : memref<96x8xf32, #tpu.memory_space<vmem>>, vector<96x8xf32>
    %cst_12 = arith.constant dense<0.000000e+00> : vector<96x128xf32>
    %16 = tpu.matmul %15, %14, %cst_12 {dimension_numbers = #tpu.dot_dimension_numbers<[1], [0], [0], [1], [0, 0, 1, 1], [], []>} : vector<96x8xf32>, vector<8x128xf32>, vector<96x128xf32> -> vector<96x128xf32>
    %17 = vector.extract_strided_slice %16 {offsets = [0, 0], sizes = [32, 128], strides = [1, 1]} : vector<96x128xf32> to vector<32x128xf32>
    %18 = vector.extract_strided_slice %16 {offsets = [32, 0], sizes = [32, 128], strides = [1, 1]} : vector<96x128xf32> to vector<32x128xf32>
    %19 = vector.extract_strided_slice %16 {offsets = [64, 0], sizes = [32, 128], strides = [1, 1]} : vector<96x128xf32> to vector<32x128xf32>
    %20 = vector.extract_strided_slice %17 {offsets = [0, 0], sizes = [8, 128], strides = [1, 1]} : vector<32x128xf32> to vector<8x128xf32>
    %21 = vector.extract_strided_slice %18 {offsets = [0, 0], sizes = [8, 128], strides = [1, 1]} : vector<32x128xf32> to vector<8x128xf32>
    %22 = vector.extract_strided_slice %19 {offsets = [0, 0], sizes = [8, 128], strides = [1, 1]} : vector<32x128xf32> to vector<8x128xf32>
    %c1_i32 = arith.constant 1 : i32
    %23 = vector.broadcast %c1_i32 : i32 to vector<1x128xi32>
    %24 = arith.cmpi sge, %2, %23 : vector<1x128xi32>
    %25 = arith.extui %24 : vector<1x128xi1> to vector<1x128xi32>
    %26 = arith.sitofp %25 : vector<1x128xi32> to vector<1x128xf32>
    %c1_i32_13 = arith.constant 1 : i32
    %27 = tpu.dynamic_rotate %20 by %c1_i32_13 dim 1 : vector<8x128xf32>, i32 -> vector<8x128xf32>
    %28 = vector.broadcast %26 : vector<1x128xf32> to vector<8x128xf32>
    %29 = arith.mulf %27, %28 : vector<8x128xf32>
    %c15_i32 = arith.constant 15 : i32
    %30 = vector.broadcast %c15_i32 : i32 to vector<1x128xi32>
    %31 = arith.cmpi slt, %2, %30 : vector<1x128xi32>
    %32 = arith.extui %31 : vector<1x128xi1> to vector<1x128xi32>
    %33 = arith.sitofp %32 : vector<1x128xi32> to vector<1x128xf32>
    %c127_i32 = arith.constant 127 : i32
    %34 = tpu.dynamic_rotate %22 by %c127_i32 dim 1 : vector<8x128xf32>, i32 -> vector<8x128xf32>
    %35 = vector.broadcast %33 : vector<1x128xf32> to vector<8x128xf32>
    %36 = arith.mulf %34, %35 : vector<8x128xf32>
    %37 = arith.addf %29, %21 : vector<8x128xf32>
    %38 = arith.addf %37, %36 : vector<8x128xf32>
    %39 = vector.extract_strided_slice %17 {offsets = [8, 0], sizes = [8, 128], strides = [1, 1]} : vector<32x128xf32> to vector<8x128xf32>
    %40 = vector.extract_strided_slice %18 {offsets = [8, 0], sizes = [8, 128], strides = [1, 1]} : vector<32x128xf32> to vector<8x128xf32>
    %41 = vector.extract_strided_slice %19 {offsets = [8, 0], sizes = [8, 128], strides = [1, 1]} : vector<32x128xf32> to vector<8x128xf32>
    %c2_i32 = arith.constant 2 : i32
    %42 = vector.broadcast %c2_i32 : i32 to vector<1x128xi32>
    %43 = arith.cmpi sge, %2, %42 : vector<1x128xi32>
    %44 = arith.extui %43 : vector<1x128xi1> to vector<1x128xi32>
    %45 = arith.sitofp %44 : vector<1x128xi32> to vector<1x128xf32>
    %c2_i32_14 = arith.constant 2 : i32
    %46 = tpu.dynamic_rotate %39 by %c2_i32_14 dim 1 : vector<8x128xf32>, i32 -> vector<8x128xf32>
    %47 = vector.broadcast %45 : vector<1x128xf32> to vector<8x128xf32>
    %48 = arith.mulf %46, %47 : vector<8x128xf32>
    %c14_i32 = arith.constant 14 : i32
    %49 = vector.broadcast %c14_i32 : i32 to vector<1x128xi32>
    %50 = arith.cmpi slt, %2, %49 : vector<1x128xi32>
    %51 = arith.extui %50 : vector<1x128xi1> to vector<1x128xi32>
    %52 = arith.sitofp %51 : vector<1x128xi32> to vector<1x128xf32>
    %c126_i32 = arith.constant 126 : i32
    %53 = tpu.dynamic_rotate %41 by %c126_i32 dim 1 : vector<8x128xf32>, i32 -> vector<8x128xf32>
    %54 = vector.broadcast %52 : vector<1x128xf32> to vector<8x128xf32>
    %55 = arith.mulf %53, %54 : vector<8x128xf32>
    %56 = arith.addf %48, %40 : vector<8x128xf32>
    %57 = arith.addf %56, %55 : vector<8x128xf32>
    %58 = vector.extract_strided_slice %17 {offsets = [16, 0], sizes = [8, 128], strides = [1, 1]} : vector<32x128xf32> to vector<8x128xf32>
    %59 = vector.extract_strided_slice %18 {offsets = [16, 0], sizes = [8, 128], strides = [1, 1]} : vector<32x128xf32> to vector<8x128xf32>
    %60 = vector.extract_strided_slice %19 {offsets = [16, 0], sizes = [8, 128], strides = [1, 1]} : vector<32x128xf32> to vector<8x128xf32>
    %c4_i32 = arith.constant 4 : i32
    %61 = vector.broadcast %c4_i32 : i32 to vector<1x128xi32>
    %62 = arith.cmpi sge, %2, %61 : vector<1x128xi32>
    %63 = arith.extui %62 : vector<1x128xi1> to vector<1x128xi32>
    %64 = arith.sitofp %63 : vector<1x128xi32> to vector<1x128xf32>
    %c4_i32_15 = arith.constant 4 : i32
    %65 = tpu.dynamic_rotate %58 by %c4_i32_15 dim 1 : vector<8x128xf32>, i32 -> vector<8x128xf32>
    %66 = vector.broadcast %64 : vector<1x128xf32> to vector<8x128xf32>
    %67 = arith.mulf %65, %66 : vector<8x128xf32>
    %c12_i32 = arith.constant 12 : i32
    %68 = vector.broadcast %c12_i32 : i32 to vector<1x128xi32>
    %69 = arith.cmpi slt, %2, %68 : vector<1x128xi32>
    %70 = arith.extui %69 : vector<1x128xi1> to vector<1x128xi32>
    %71 = arith.sitofp %70 : vector<1x128xi32> to vector<1x128xf32>
    %c124_i32 = arith.constant 124 : i32
    %72 = tpu.dynamic_rotate %60 by %c124_i32 dim 1 : vector<8x128xf32>, i32 -> vector<8x128xf32>
    %73 = vector.broadcast %71 : vector<1x128xf32> to vector<8x128xf32>
    %74 = arith.mulf %72, %73 : vector<8x128xf32>
    %75 = arith.addf %67, %59 : vector<8x128xf32>
    %76 = arith.addf %75, %74 : vector<8x128xf32>
    %77 = arith.addf %57, %76 : vector<8x128xf32>
    %78 = vector.extract_strided_slice %17 {offsets = [24, 0], sizes = [8, 128], strides = [1, 1]} : vector<32x128xf32> to vector<8x128xf32>
    %79 = vector.extract_strided_slice %18 {offsets = [24, 0], sizes = [8, 128], strides = [1, 1]} : vector<32x128xf32> to vector<8x128xf32>
    %80 = vector.extract_strided_slice %19 {offsets = [24, 0], sizes = [8, 128], strides = [1, 1]} : vector<32x128xf32> to vector<8x128xf32>
    %c8_i32 = arith.constant 8 : i32
    %81 = vector.broadcast %c8_i32 : i32 to vector<1x128xi32>
    %82 = arith.cmpi sge, %2, %81 : vector<1x128xi32>
    %83 = arith.extui %82 : vector<1x128xi1> to vector<1x128xi32>
    %84 = arith.sitofp %83 : vector<1x128xi32> to vector<1x128xf32>
    %c8_i32_16 = arith.constant 8 : i32
    %85 = tpu.dynamic_rotate %78 by %c8_i32_16 dim 1 : vector<8x128xf32>, i32 -> vector<8x128xf32>
    %86 = vector.broadcast %84 : vector<1x128xf32> to vector<8x128xf32>
    %87 = arith.mulf %85, %86 : vector<8x128xf32>
    %c8_i32_17 = arith.constant 8 : i32
    %88 = vector.broadcast %c8_i32_17 : i32 to vector<1x128xi32>
    %89 = arith.cmpi slt, %2, %88 : vector<1x128xi32>
    %90 = arith.extui %89 : vector<1x128xi1> to vector<1x128xi32>
    %91 = arith.sitofp %90 : vector<1x128xi32> to vector<1x128xf32>
    %c120_i32 = arith.constant 120 : i32
    %92 = tpu.dynamic_rotate %80 by %c120_i32 dim 1 : vector<8x128xf32>, i32 -> vector<8x128xf32>
    %93 = vector.broadcast %91 : vector<1x128xf32> to vector<8x128xf32>
    %94 = arith.mulf %92, %93 : vector<8x128xf32>
    %95 = arith.addf %87, %79 : vector<8x128xf32>
    %96 = arith.addf %95, %94 : vector<8x128xf32>
    %97 = arith.addf %77, %96 : vector<8x128xf32>
    %98 = tpu.concatenate %38, %57, %77, %97 in 0 : vector<8x128xf32>, vector<8x128xf32>, vector<8x128xf32>, vector<8x128xf32> -> vector<32x128xf32>
    %99 = arith.addf %98, %4 : vector<32x128xf32>
    %c0_18 = arith.constant 0 : index
    %c0_19 = arith.constant 0 : index
    %100 = vector.load %arg7[%c0_18, %c0_19] : memref<32x1xf32, #tpu.memory_space<vmem>>, vector<32x1xf32>
    %101 = vector.broadcast %100 : vector<32x1xf32> to vector<32x128xf32>
    %102 = arith.mulf %99, %101 : vector<32x128xf32>
    %c0_20 = arith.constant 0 : index
    %c0_21 = arith.constant 0 : index
    %103 = vector.load %arg8[%c0_20, %c0_21] : memref<32x1xf32, #tpu.memory_space<vmem>>, vector<32x1xf32>
    %104 = vector.broadcast %103 : vector<32x1xf32> to vector<32x128xf32>
    %105 = arith.addf %102, %104 : vector<32x128xf32>
    %cst_22 = arith.constant 0.000000e+00 : f32
    %106 = vector.broadcast %cst_22 : f32 to vector<32x128xf32>
    %107 = arith.cmpf oge, %105, %106 : vector<32x128xf32>
    %108 = vector.broadcast %1 : f32 to vector<32x128xf32>
    %109 = arith.mulf %108, %105 : vector<32x128xf32>
    %110 = arith.select %107, %105, %109 : vector<32x128xi1>, vector<32x128xf32>
    %c0_23 = arith.constant 0 : index
    %c0_24 = arith.constant 0 : index
    %c0_25 = arith.constant 0 : index
    %111 = vector.load %arg9[%c0_23, %c0_24, %c0_25] : memref<1x32x128xf32, #tpu.memory_space<vmem>>, vector<1x32x128xf32>
    %112 = vector.shape_cast %111 : vector<1x32x128xf32> to vector<32x128xf32>
    %113 = vector.shape_cast %110 : vector<32x128xf32> to vector<1x32x128xf32>
    tpu.vector_store %arg9[%c0_23, %c0_24, %c0_25], %113 {strides = array<i32>} : memref<1x32x128xf32, #tpu.memory_space<vmem>>, vector<1x32x128xf32>,
    return
  }
  func.func @transform_0(%arg0: i32) -> i32 {
    %c0_i32 = arith.constant 0 : i32
    %c0_i32_0 = arith.constant 0 : i32
    return %c0_i32 : i32
  }
  func.func @transform_1(%arg0: i32) -> (i32, i32) {
    %c0_i32 = arith.constant 0 : i32
    %c0_i32_0 = arith.constant 0 : i32
    %c0_i32_1 = arith.constant 0 : i32
    return %c0_i32, %c0_i32_0 : i32, i32
  }
  func.func @transform_2(%arg0: i32) -> (i32, i32, i32) {
    %c0_i32 = arith.constant 0 : i32
    %c0_i32_0 = arith.constant 0 : i32
    %c0_i32_1 = arith.constant 0 : i32
    return %arg0, %c0_i32, %c0_i32_0 : i32, i32, i32
  }
  func.func @transform_3(%arg0: i32) -> (i32, i32) {
    %c0_i32 = arith.constant 0 : i32
    %c0_i32_0 = arith.constant 0 : i32
    %c0_i32_1 = arith.constant 0 : i32
    return %c0_i32, %c0_i32_0 : i32, i32
  }
  func.func @transform_4(%arg0: i32) -> (i32, i32) {
    %c0_i32 = arith.constant 0 : i32
    %c0_i32_0 = arith.constant 0 : i32
    %c0_i32_1 = arith.constant 0 : i32
    return %c0_i32, %c0_i32_0 : i32, i32
  }
  func.func @transform_5(%arg0: i32) -> (i32, i32) {
    %c0_i32 = arith.constant 0 : i32
    %c0_i32_0 = arith.constant 0 : i32
    %c0_i32_1 = arith.constant 0 : i32
    return %c0_i32, %c0_i32_0 : i32, i32
  }
  func.func @transform_6(%arg0: i32) -> (i32, i32) {
    %c0_i32 = arith.constant 0 : i32
    %c0_i32_0 = arith.constant 0 : i32
    %c0_i32_1 = arith.constant 0 : i32
    return %c0_i32, %c0_i32_0 : i32, i32
  }
  func.func @transform_7(%arg0: i32) -> (i32, i32) {
    %c0_i32 = arith.constant 0 : i32
    %c0_i32_0 = arith.constant 0 : i32
    %c0_i32_1 = arith.constant 0 : i32
    return %c0_i32, %c0_i32_0 : i32, i32
  }
  func.func @transform_8(%arg0: i32) -> (i32, i32, i32) {
    %c0_i32 = arith.constant 0 : i32
    %c0_i32_0 = arith.constant 0 : i32
    %c0_i32_1 = arith.constant 0 : i32
    return %arg0, %c0_i32, %c0_i32_0 : i32, i32, i32
  }
}

</mosaic_0001>

<llo_original>
// kernel: tpu_custom_call.1
$region0: #{tpu_custom_call.1}
  #allocation0 [shape = 'u32[]', space=smem, size = 0x4, offset = 0x4, fixed_abs, tag = 'smem constant byte address 0x4 - core index']
  #allocation1 [shape = 'u32[72,128]{1,0:T(1,128)}', space=vmem, size = 0x9000, scoped, tag = 'internal scratch']
  %s0 = inlined_call_operand.vmem [shape: f32[2], index: 0, kind: input, shape index: {}]
  %s1 = inlined_call_operand.vmem [shape: s32[1,128], index: 1, kind: input, shape index: {}]
  %s2 = inlined_call_operand.vmem [shape: f32[1,32,128], index: 2, kind: input, shape index: {}]
  %s3 = inlined_call_operand.vmem [shape: f32[8,32], index: 3, kind: input, shape index: {}]
  %s4 = inlined_call_operand.vmem [shape: f32[8,1], index: 4, kind: input, shape index: {}]
  %s5 = inlined_call_operand.vmem [shape: f32[96,8], index: 5, kind: input, shape index: {}]
  %s6 = inlined_call_operand.vmem [shape: f32[32,1], index: 6, kind: input, shape index: {}]
  %s7 = inlined_call_operand.vmem [shape: f32[32,1], index: 7, kind: input, shape index: {}]
  %s8 = inlined_call_operand.hbm [shape: f32[1,32,128], index: 8, kind: output, shape index: {}]
  %s9 = sld [smem:[#allocation0]]
  $region46: #{tpu_custom_call.1} parent=0
    _
  %s11 = ssub.s32 1, %s9
  %s12 = scalar_select 0, %s11, %s9
  $region1: #{tpu_custom_call.1} parent=0
    #allocation2 [shape = 'u8[512]{0}', space=smem, size = 0x200, scoped, tag = 'input window, operand 0, single buffered']
    #allocation3 [shape = 's32[1]{0}', space=sflag, size = 0x4, scoped, tag = 'scoped memory for tpu_custom_call.1']
    #allocation4 [shape = 's32[1]{0}', space=sflag, size = 0x4, scoped, tag = 'scoped memory for tpu_custom_call.1']
    #allocation5 [shape = 'u8[16384]{0}', space=vmem, size = 0x4000, scoped, tag = 'output window, operand 0, single buffered']
    %13 = vsyncpa [#allocation4], 0
    %14 = vsyncpa [#allocation3], 0
    // Predicated region
    $region2: #{tpu_custom_call.1} parent=1 // pred_check
      _
    $region3: #{tpu_custom_call.1} parent=1 // pred_check_branch
      %16 = sbr.rel (0) target = $region5
    $region4: #{tpu_custom_call.1} parent=1 // pred_region
      %18 = vsyncadd [#allocation4], 0
      %s20 = sshll.u32 %s0, 4
      %s21 = int_to_ptr.vmem [resolvable:$true] %s20
      %23 = dma.vmem_to_smem %s21, 16, [#allocation2], [#allocation4]
    $region5: #{tpu_custom_call.1} parent=1 // pred_fallthru
      _
    // Predicated region
    $region6: #{tpu_custom_call.1} parent=1 // pred_check
      _
    $region7: #{tpu_custom_call.1} parent=1 // pred_check_branch
      %25 = sbr.rel (0) target = $region9
    $region8: #{tpu_custom_call.1} parent=1 // pred_region
      _
    $region9: #{tpu_custom_call.1} parent=1 // pred_fallthru
      _
    // Predicated region
    $region10: #{tpu_custom_call.1} parent=1 // pred_check
      _
    $region11: #{tpu_custom_call.1} parent=1 // pred_check_branch
      %27 = sbr.rel (0) target = $region13
    $region12: #{tpu_custom_call.1} parent=1 // pred_region
      _
    $region13: #{tpu_custom_call.1} parent=1 // pred_fallthru
      _
    // Predicated region
    $region14: #{tpu_custom_call.1} parent=1 // pred_check
      _
    $region15: #{tpu_custom_call.1} parent=1 // pred_check_branch
      %29 = sbr.rel (0) target = $region17
    $region16: #{tpu_custom_call.1} parent=1 // pred_region
      _
    $region17: #{tpu_custom_call.1} parent=1 // pred_fallthru
      _
    // Predicated region
    $region18: #{tpu_custom_call.1} parent=1 // pred_check
      _
    $region19: #{tpu_custom_call.1} parent=1 // pred_check_branch
      %31 = sbr.rel (0) target = $region21
    $region20: #{tpu_custom_call.1} parent=1 // pred_region
      _
    $region21: #{tpu_custom_call.1} parent=1 // pred_fallthru
      _
    // Predicated region
    $region22: #{tpu_custom_call.1} parent=1 // pred_check
      _
    $region23: #{tpu_custom_call.1} parent=1 // pred_check_branch
      %33 = sbr.rel (0) target = $region25
    $region24: #{tpu_custom_call.1} parent=1 // pred_region
      _
    $region25: #{tpu_custom_call.1} parent=1 // pred_fallthru
      _
    // Predicated region
    $region26: #{tpu_custom_call.1} parent=1 // pred_check
      _
    $region27: #{tpu_custom_call.1} parent=1 // pred_check_branch
      %35 = sbr.rel (0) target = $region29
    $region28: #{tpu_custom_call.1} parent=1 // pred_region
      _
    $region29: #{tpu_custom_call.1} parent=1 // pred_fallthru
      _
    // Predicated region
    $region30: #{tpu_custom_call.1} parent=1 // pred_check
      _
    $region31: #{tpu_custom_call.1} parent=1 // pred_check_branch
      %37 = sbr.rel (0) target = $region33
    $region32: #{tpu_custom_call.1} parent=1 // pred_region
      _
    $region33: #{tpu_custom_call.1} parent=1 // pred_fallthru
      _
    // Predicated region
    $region34: #{tpu_custom_call.1} parent=1 // pred_check
      _
    $region35: #{tpu_custom_call.1} parent=1 // pred_check_branch
      %39 = sbr.rel (0) target = $region37
    $region36: #{tpu_custom_call.1} parent=1 // pred_region
      %41 = dma.done [#allocation4], 16
    $region37: #{tpu_custom_call.1} parent=1 // pred_fallthru
      _
    %42 = sfence
    %s43 = sld [smem:[#allocation2]]
    %s44 = sld [smem:[#allocation2 + $0x1]]
    %v45 = vld [vmem:[%s1] sm:$0x1]
    %v46 = vld [vmem:[%s2] sm:$0xff]
    %v47 = vld [vmem:[%s2 + $0x8] sm:$0xff]
    %v48 = vld [vmem:[%s2 + $0x10] sm:$0xff]
    %v49 = vld [vmem:[%s2 + $0x18] sm:$0xff]
    %v50 = vld [vmem:[%s3] sm:$0xff]
    %v51 = vld [vmem:[%s4] sm:$0xff]
    %53 = vset.pattern.permute.xlu0 0
    %54 = vperm.xlu0 %53, %v51
    %v55 = vpop.permute.xlu0 %54
    %vm57 = vcmask 261120
    %v59 = vsel %vm57, %v50, 0
    %61 = vmatpush.msra.mxu0 0.0
    %62 = vmatpush.msra.mxu0 0.0
    %63 = vmatpush.msra.mxu0 0.0
    %64 = vmatpush.msra.mxu0 0.0
    %65 = vmatpush.msra.mxu0 0.0
    %66 = vmatpush.msra.mxu0 0.0
    %67 = vmatpush.msra.mxu0 0.0
    %68 = vmatpush.msra.mxu0 0.0
    %69 = vmatpush.msra.mxu0 0.0
    %70 = vmatpush.msra.mxu0 0.0
    %71 = vmatpush.msra.mxu0 0.0
    %72 = vmatpush.msra.mxu0 0.0
    %73 = vmatpush.msra.mxu0 %v49
    %74 = vmatpush.msra.mxu0 %v48
    %75 = vmatpush.msra.mxu0 %v47
    %76 = vmatpush.msra.mxu0 %v46
    %77 = vmatmul.f32.gmra.mxu0 %v59
    %v78 = vpop.f32.mrf.mxu0
    %v79 = vadd.f32 %v55, %v78
    %80 = vdwg.mxu0
    %vm81 = vcmp.ge.f32.partialorder %v79, 0.0
    %v82 = vstv %s43
    %v83 = vmul.f32 %v82, %v79
    %v84 = vsel %vm81, %v79, %v83
    %v85 = vld [vmem:[%s5] sm:$0xff]
    %v86 = vld [vmem:[%s5 + $0x8] sm:$0xff]
    %v87 = vld [vmem:[%s5 + $0x10] sm:$0xff]
    %v88 = vld [vmem:[%s5 + $0x18] sm:$0xff]
    %v89 = vld [vmem:[%s5 + $0x20] sm:$0xff]
    %v90 = vld [vmem:[%s5 + $0x28] sm:$0xff]
    %v91 = vld [vmem:[%s5 + $0x30] sm:$0xff]
    %v92 = vld [vmem:[%s5 + $0x38] sm:$0xff]
    %v93 = vld [vmem:[%s5 + $0x40] sm:$0xff]
    %v94 = vld [vmem:[%s5 + $0x48] sm:$0xff]
    %v95 = vld [vmem:[%s5 + $0x50] sm:$0xff]
    %v96 = vld [vmem:[%s5 + $0x58] sm:$0xff]
    %vm97 = vcmask 64512
    %v99 = vsel %vm97, %v85, 0
    %v102 = vsel %vm97, %v86, 0
    %v105 = vsel %vm97, %v87, 0
    %v108 = vsel %vm97, %v88, 0
    %v111 = vsel %vm97, %v89, 0
    %v114 = vsel %vm97, %v90, 0
    %v117 = vsel %vm97, %v91, 0
    %v120 = vsel %vm97, %v92, 0
    %v123 = vsel %vm97, %v93, 0
    %v126 = vsel %vm97, %v94, 0
    %v129 = vsel %vm97, %v95, 0
    %v132 = vsel %vm97, %v96, 0
    %134 = vmatpush.msra.mxu0 0.0
    %135 = vmatpush.msra.mxu0 0.0
    %136 = vmatpush.msra.mxu0 0.0
    %137 = vmatpush.msra.mxu0 0.0
    %138 = vmatpush.msra.mxu0 0.0
    %139 = vmatpush.msra.mxu0 0.0
    %140 = vmatpush.msra.mxu0 0.0
    %141 = vmatpush.msra.mxu0 0.0
    %142 = vmatpush.msra.mxu0 0.0
    %143 = vmatpush.msra.mxu0 0.0
    %144 = vmatpush.msra.mxu0 0.0
    %145 = vmatpush.msra.mxu0 0.0
    %146 = vmatpush.msra.mxu0 0.0
    %147 = vmatpush.msra.mxu0 0.0
    %148 = vmatpush.msra.mxu0 0.0
    %149 = vmatpush.msra.mxu0 %v84
    %150 = vmatmul.f32.gmra.mxu0 %v99
    %v151 = vpop.f32.mrf.mxu0
    %v152 = vadd.f32 0.0, %v151
    %153 = vmatmul.f32.gmra.mxu0 %v102
    %v154 = vpop.f32.mrf.mxu0
    %v155 = vadd.f32 0.0, %v154
    %156 = vmatmul.f32.gmra.mxu0 %v105
    %v157 = vpop.f32.mrf.mxu0
    %v158 = vadd.f32 0.0, %v157
    %159 = vmatmul.f32.gmra.mxu0 %v108
    %v160 = vpop.f32.mrf.mxu0
    %v161 = vadd.f32 0.0, %v160
    %162 = vmatmul.f32.gmra.mxu0 %v111
    %v163 = vpop.f32.mrf.mxu0
    %v164 = vadd.f32 0.0, %v163
    %165 = vmatmul.f32.gmra.mxu0 %v114
    %v166 = vpop.f32.mrf.mxu0
    %v167 = vadd.f32 0.0, %v166
    %168 = vmatmul.f32.gmra.mxu0 %v117
    %v169 = vpop.f32.mrf.mxu0
    %v170 = vadd.f32 0.0, %v169
    %171 = vmatmul.f32.gmra.mxu0 %v120
    %v172 = vpop.f32.mrf.mxu0
    %v173 = vadd.f32 0.0, %v172
    %174 = vmatmul.f32.gmra.mxu0 %v123
    %v175 = vpop.f32.mrf.mxu0
    %v176 = vadd.f32 0.0, %v175
    %177 = vmatmul.f32.gmra.mxu0 %v126
    %v178 = vpop.f32.mrf.mxu0
    %v179 = vadd.f32 0.0, %v178
    %180 = vmatmul.f32.gmra.mxu0 %v129
    %v181 = vpop.f32.mrf.mxu0
    %v182 = vadd.f32 0.0, %v181
    %183 = vmatmul.f32.gmra.mxu0 %v132
    %v184 = vpop.f32.mrf.mxu0
    %v185 = vadd.f32 0.0, %v184
    %186 = vdwg.mxu0
    %vm187 = vcmp.ge.s32.totalorder %v45, 1
    %v188 = vsel %vm187, 1, 0
    %v189 = vcvt.s32.f32 %v188
    %190 = vrot.lane.b32.xlu0 %v152, 1
    %v191 = vpop.permute.xlu0 %190
    %v193 = vperm.slane %v189, 0
    %v195 = vmul.f32 %v191, %v193
    %vm196 = vcmp.lt.s32.totalorder %v45, 15
    %v197 = vsel %vm196, 1, 0
    %v198 = vcvt.s32.f32 %v197
    %199 = vrot.lane.b32.xlu0 %v176, 127
    %v200 = vpop.permute.xlu0 %199
    %v202 = vperm.slane %v198, 0
    %v204 = vmul.f32 %v200, %v202
    %v205 = vadd.f32 %v195, %v164
    %v206 = vadd.f32 %v205, %v204
    %vm207 = vcmp.ge.s32.totalorder %v45, 2
    %v208 = vsel %vm207, 1, 0
    %v209 = vcvt.s32.f32 %v208
    %210 = vrot.lane.b32.xlu0 %v155, 2
    %v211 = vpop.permute.xlu0 %210
    %v213 = vperm.slane %v209, 0
    %v215 = vmul.f32 %v211, %v213
    %vm216 = vcmp.lt.s32.totalorder %v45, 14
    %v217 = vsel %vm216, 1, 0
    %v218 = vcvt.s32.f32 %v217
    %219 = vrot.lane.b32.xlu0 %v179, 126
    %v220 = vpop.permute.xlu0 %219
    %v222 = vperm.slane %v218, 0
    %v224 = vmul.f32 %v220, %v222
    %v225 = vadd.f32 %v215, %v167
    %v226 = vadd.f32 %v225, %v224
    %vm227 = vcmp.ge.s32.totalorder %v45, 4
    %v228 = vsel %vm227, 1, 0
    %v229 = vcvt.s32.f32 %v228
    %230 = vrot.lane.b32.xlu0 %v158, 4
    %v231 = vpop.permute.xlu0 %230
    %v233 = vperm.slane %v229, 0
    %v235 = vmul.f32 %v231, %v233
    %vm236 = vcmp.lt.s32.totalorder %v45, 12
    %v237 = vsel %vm236, 1, 0
    %v238 = vcvt.s32.f32 %v237
    %239 = vrot.lane.b32.xlu0 %v182, 124
    %v240 = vpop.permute.xlu0 %239
    %v242 = vperm.slane %v238, 0
    %v244 = vmul.f32 %v240, %v242
    %v245 = vadd.f32 %v235, %v170
    %v246 = vadd.f32 %v245, %v244
    %v247 = vadd.f32 %v226, %v246
    %vm248 = vcmp.ge.s32.totalorder %v45, 8
    %v249 = vsel %vm248, 1, 0
    %v250 = vcvt.s32.f32 %v249
    %251 = vrot.lane.b32.xlu0 %v161, 8
    %v252 = vpop.permute.xlu0 %251
    %v254 = vperm.slane %v250, 0
    %v256 = vmul.f32 %v252, %v254
    %vm257 = vcmp.lt.s32.totalorder %v45, 8
    %v258 = vsel %vm257, 1, 0
    %v259 = vcvt.s32.f32 %v258
    %260 = vrot.lane.b32.xlu0 %v185, 120
    %v261 = vpop.permute.xlu0 %260
    %v263 = vperm.slane %v259, 0
    %v265 = vmul.f32 %v261, %v263
    %v266 = vadd.f32 %v256, %v173
    %v267 = vadd.f32 %v266, %v265
    %v268 = vadd.f32 %v247, %v267
    %v269 = vadd.f32 %v206, %v46
    %v270 = vadd.f32 %v226, %v47
    %v271 = vadd.f32 %v247, %v48
    %v272 = vadd.f32 %v268, %v49
    %v273 = vld [vmem:[%s6] sm:$0xff]
    %v274 = vld [vmem:[%s6 + $0x8] sm:$0xff]
    %v275 = vld [vmem:[%s6 + $0x10] sm:$0xff]
    %v276 = vld [vmem:[%s6 + $0x18] sm:$0xff]
    %278 = vset.pattern.permute.xlu0 0
    %279 = vperm.xlu0 %278, %v273
    %v280 = vpop.permute.xlu0 %279
    %283 = vset.pattern.permute.xlu0 0
    %284 = vperm.xlu0 %283, %v274
    %v285 = vpop.permute.xlu0 %284
    %288 = vset.pattern.permute.xlu0 0
    %289 = vperm.xlu0 %288, %v275
    %v290 = vpop.permute.xlu0 %289
    %293 = vset.pattern.permute.xlu0 0
    %294 = vperm.xlu0 %293, %v276
    %v295 = vpop.permute.xlu0 %294
    %v297 = vmul.f32 %v269, %v280
    %v298 = vmul.f32 %v270, %v285
    %v299 = vmul.f32 %v271, %v290
    %v300 = vmul.f32 %v272, %v295
    %v301 = vld [vmem:[%s7] sm:$0xff]
    %v302 = vld [vmem:[%s7 + $0x8] sm:$0xff]
    %v303 = vld [vmem:[%s7 + $0x10] sm:$0xff]
    %v304 = vld [vmem:[%s7 + $0x18] sm:$0xff]
    %306 = vset.pattern.permute.xlu0 0
    %307 = vperm.xlu0 %306, %v301
    %v308 = vpop.permute.xlu0 %307
    %311 = vset.pattern.permute.xlu0 0
    %312 = vperm.xlu0 %311, %v302
    %v313 = vpop.permute.xlu0 %312
    %316 = vset.pattern.permute.xlu0 0
    %317 = vperm.xlu0 %316, %v303
    %v318 = vpop.permute.xlu0 %317
    %321 = vset.pattern.permute.xlu0 0
    %322 = vperm.xlu0 %321, %v304
    %v323 = vpop.permute.xlu0 %322
    %v325 = vadd.f32 %v297, %v308
    %v326 = vadd.f32 %v298, %v313
    %v327 = vadd.f32 %v299, %v318
    %v328 = vadd.f32 %v300, %v323
    %vm329 = vcmp.ge.f32.partialorder %v325, 0.0
    %vm330 = vcmp.ge.f32.partialorder %v326, 0.0
    %vm331 = vcmp.ge.f32.partialorder %v327, 0.0
    %vm332 = vcmp.ge.f32.partialorder %v328, 0.0
    %v333 = vstv %s44
    %v334 = vmul.f32 %v333, %v325
    %v335 = vmul.f32 %v333, %v326
    %v336 = vmul.f32 %v333, %v327
    %v337 = vmul.f32 %v333, %v328
    %v338 = vsel %vm329, %v325, %v334
    %v339 = vsel %vm330, %v326, %v335
    %v340 = vsel %vm331, %v327, %v336
    %v341 = vsel %vm332, %v328, %v337
    %342 = vst [vmem:[#allocation5] sm:$0xff] %v338
    %343 = vst [vmem:[#allocation5 + $0x8] sm:$0xff] %v339
    %344 = vst [vmem:[#allocation5 + $0x10] sm:$0xff] %v340
    %345 = vst [vmem:[#allocation5 + $0x18] sm:$0xff] %v341
    // Predicated region
    $region38: #{tpu_custom_call.1} parent=1 // pred_check
      _
    $region39: #{tpu_custom_call.1} parent=1 // pred_check_branch
      %347 = sbr.rel (0) target = $region41
    $region40: #{tpu_custom_call.1} parent=1 // pred_region
      %349 = vsyncadd [#allocation3], 0
      %s350 = sshll.u32 [#allocation5], 4
      %s351 = int_to_ptr.vmem [resolvable:$true] %s350
      %s352 = sshll.u32 %s8, 4
      %s353 = int_to_ptr.hbm [resolvable:$true] %s352
      %358 = dma.vmem_to_hbm [thread:$0]  %s351, 512, %s353, [#allocation3], 128, 128, 8
    $region41: #{tpu_custom_call.1} parent=1 // pred_fallthru
      _
    // Predicated region
    $region42: #{tpu_custom_call.1} parent=1 // pred_check
      _
    $region43: #{tpu_custom_call.1} parent=1 // pred_check_branch
      %360 = sbr.rel (0) target = $region45
    $region44: #{tpu_custom_call.1} parent=1 // pred_region
      %362 = dma.done [#allocation3], 512
    $region45: #{tpu_custom_call.1} parent=1 // pred_fallthru
      _
    %363 = vsyncpa [#allocation3], 1
    %364 = vsyncpa [#allocation4], 1

</llo_original>
